<compile_context>
chip_gen: v5e
topology: v5e:2x2
jax: 0.10.0
libtpu: 0.0.40
codegen_flags: <defaults>
</compile_context>

<pallas_src>
import functools

import jax
import jax.numpy as jnp
from jax.experimental import pallas as pl
from jax.experimental.pallas import tpu as pltpu

LANE = 128      # TPU lane width
H1 = 128        # first hidden dim (already lane-dense)
H2 = 64         # second hidden dim (padded to H2_PAD inside the kernel)
H2_PAD = 128
OUT_PAD = 128   # padded output lane width


def _round8(n):
    return ((n + 7) // 8) * 8


def _param_offsets(input_dim):
    """Row offsets of each parameter segment inside the packed (rows, 128) slab.

    Every segment starts on an 8-row (sublane) boundary so in-kernel static
    slices stay tile-aligned.
    """
    off = 0
    w1_off = off; off += _round8(input_dim)
    b1_off = off; off += 8
    w2_off = off; off += H1
    b2_off = off; off += 8
    w3_off = off; off += H2_PAD
    b3_off = off; off += 8
    return (w1_off, b1_off, w2_off, b2_off, w3_off, b3_off), off


def pack_params(params, input_dim, output_dim):
    """Pack (w1,b1,w2,b2,w3,b3) into one lane-dense f32 slab. Do this ONCE and
    reuse the slab across forward calls (weights never change per-step)."""
    w1, b1, w2, b2, w3, b3 = params
    (w1o, b1o, w2o, b2o, w3o, b3o), total = _param_offsets(input_dim)
    slab = jnp.zeros((total, LANE), jnp.float32)
    slab = slab.at[w1o:w1o + input_dim, :H1].set(w1.astype(jnp.float32))
    slab = slab.at[b1o, :H1].set(b1.reshape(H1).astype(jnp.float32))
    slab = slab.at[w2o:w2o + H1, :H2].set(w2.astype(jnp.float32))
    slab = slab.at[b2o, :H2].set(b2.reshape(H2).astype(jnp.float32))
    slab = slab.at[w3o:w3o + H2, :output_dim].set(w3.astype(jnp.float32))
    slab = slab.at[b3o, :output_dim].set(b3.reshape(output_dim).astype(jnp.float32))
    return slab


def _make_kernel(in_pad, offs):
    w1_off, b1_off, w2_off, b2_off, w3_off, b3_off = offs

    def kernel(x_ref, p_ref, o_ref):
        x = x_ref[...]                                      # (TB, in_pad)
        # Static, sublane-aligned slices of the resident parameter slab.
        w1 = p_ref[pl.ds(w1_off, in_pad), :]                # (in_pad, 128) pad rows zero
        b1 = p_ref[pl.ds(b1_off, 1), :]                     # (1, 128)
        w2 = p_ref[pl.ds(w2_off, H1), :]                    # (128, 128)  cols 64: zero
        b2 = p_ref[pl.ds(b2_off, 1), :]                     # (1, 128)
        w3 = p_ref[pl.ds(w3_off, H2_PAD), :]                # (128, 128)  rows 64:/cols out: zero
        b3 = p_ref[pl.ds(b3_off, 1), :]                     # (1, 128)

        h1 = jnp.maximum(
            jnp.dot(x, w1, preferred_element_type=jnp.float32) + b1, 0.0)
        h2 = jnp.maximum(
            jnp.dot(h1, w2, preferred_element_type=jnp.float32) + b2, 0.0)
        out = jnp.dot(h2, w3, preferred_element_type=jnp.float32) + b3
        o_ref[...] = out.astype(o_ref.dtype)                # lane-dense (TB, 128) store

    return kernel


def _pick_tile(batch):
    # Fewer, fatter grid steps (each step carries ~0.35 us fixed overhead), but
    # keep >= 2 steps when batch >= 256 so the parallel axis can use both
    # TensorCores on v7x.
    for cand in (4096, 2048, 1024, 512, 256, 128):
        if batch % cand == 0 and (batch < 256 or batch // cand >= 2):
            return cand
    return batch


@functools.partial(jax.jit, static_argnames=("output_dim",))
def dqn_forward(x, packed_params, output_dim):
    batch, input_dim = x.shape
    total_rows = packed_params.shape[0]
    offs, _ = _param_offsets(input_dim)

    # Pad the feature dim to a sublane multiple so all in-kernel slices are
    # (8,128)-tile aligned. Exact: padded x columns and padded w1 rows are zero.
    in_pad = _round8(input_dim)
    if in_pad != input_dim:
        x = jnp.pad(x, ((0, 0), (0, in_pad - input_dim)))

    tb = _pick_tile(batch)
    grid = (batch // tb,)

    flops = 2 * batch * (in_pad * H1 + H1 * H2_PAD + H2_PAD * OUT_PAD)
    bytes_accessed = 4 * (batch * in_pad + packed_params.size + batch * OUT_PAD)

    out_padded = pl.pallas_call(
        _make_kernel(in_pad, offs),
        out_shape=jax.ShapeDtypeStruct((batch, OUT_PAD), jnp.float32),
        grid_spec=pltpu.PrefetchScalarGridSpec(
            num_scalar_prefetch=0,
            grid=grid,
            in_specs=[
                # x tile: double-buffered across grid steps.
                pl.BlockSpec((tb, in_pad), lambda i: (i, 0)),
                # Constant parameter slab: same block every step -> single buffer.
                pl.BlockSpec((total_rows, LANE), lambda i: (0, 0),
                             pipeline_mode=pl.Buffered(1)),
            ],
            out_specs=pl.BlockSpec((tb, OUT_PAD), lambda i: (i, 0)),
        ),
        compiler_params=pltpu.CompilerParams(
            dimension_semantics=("parallel",)),
        cost_estimate=pl.CostEstimate(
            flops=flops, transcendentals=0, bytes_accessed=bytes_accessed),
    )(x, packed_params)

    # Drop the zero-padded output lanes.
    return out_padded[:, :output_dim]


def init_linear(key, in_features, out_features):
    # Mimic PyTorch nn.Linear default init: U(-1/sqrt(fan_in), 1/sqrt(fan_in)).
    kw, kb = jax.random.split(key)
    bound = 1.0 / (in_features ** 0.5)
    # Stored as (in, out) = transpose of PyTorch's (out, in).
    w = jax.random.uniform(kw, (in_features, out_features), jnp.float32, -bound, bound)
    b = jax.random.uniform(kb, (1, out_features), jnp.float32, -bound, bound)
    return w, b


def init_dqn_params(key, input_dim, output_dim):
    k1, k2, k3 = jax.random.split(key, 3)
    w1, b1 = init_linear(k1, input_dim, 128)
    w2, b2 = init_linear(k2, 128, 64)
    w3, b3 = init_linear(k3, 64, output_dim)
    return (w1, b1, w2, b2, w3, b3)


def _reference(x, params):
    w1, b1, w2, b2, w3, b3 = params
    h = jnp.maximum(x @ w1 + b1, 0.0)
    h = jnp.maximum(h @ w2 + b2, 0.0)
    return h @ w3 + b3


if __name__ == "__main__":
    key = jax.random.PRNGKey(0)
    k_x, k_x2, k_p = jax.random.split(key, 3)

    input_dim = 32
    output_dim = 4
    params = init_dqn_params(k_p, input_dim, output_dim)

    # Pack parameters once (reusable across every forward call).
    packed = pack_params(params, input_dim, output_dim)

    # Small inference-sized batch: single grid step.
    batch = 8
    x = jax.random.normal(k_x, (batch, input_dim), jnp.float32)
    out = jax.block_until_ready(dqn_forward(x, packed, output_dim))
    ref = _reference(x, params)
    assert out.shape == (batch, output_dim)
    assert jnp.allclose(out, ref, atol=1e-5, rtol=1e-5)

    # Training-sized batch: exercises the multi-step parallel grid path (tb=128).
    batch2 = 256
    x2 = jax.random.normal(k_x2, (batch2, input_dim), jnp.float32)
    out2 = jax.block_until_ready(dqn_forward(x2, packed, output_dim))
    ref2 = _reference(x2, params)
    assert out2.shape == (batch2, output_dim)
    assert jnp.allclose(out2, ref2, atol=1e-5, rtol=1e-5)

    print("KERNEL_OK")
</pallas_src>

<mosaic_0001>
module attributes {stable_mosaic.version = 11 : i64} {
  func.func @kernel(%arg0: i32, %arg1: memref<8x32xf32, #tpu.memory_space<vmem>>, %arg2: memref<312x128xf32, #tpu.memory_space<vmem>>, %arg3: memref<8x128xf32, #tpu.memory_space<vmem>>) attributes {dimension_semantics = [#tpu.dimension_semantics<parallel>], iteration_bounds = array<i64: 1>, scalar_prefetch = 0 : i64, scratch_operands = 0 : i64, tpu.core_type = #tpu.core_type<tc>, window_params = [{transform_indices = @transform_0, window_bounds = array<i64: 8, 32>}, {pipeline_mode = #tpu.pipeline_mode<synchronous>, transform_indices = @transform_1, window_bounds = array<i64: 312, 128>}, {transform_indices = @transform_2, window_bounds = array<i64: 8, 128>}]} {
    %c0 = arith.constant 0 : index
    %c0_0 = arith.constant 0 : index
    %0 = vector.load %arg1[%c0, %c0_0] : memref<8x32xf32, #tpu.memory_space<vmem>>, vector<8x32xf32>
    %c0_1 = arith.constant 0 : index
    %c0_2 = arith.constant 0 : index
    %1 = vector.load %arg2[%c0_1, %c0_2] : memref<312x128xf32, #tpu.memory_space<vmem>>, vector<32x128xf32>
    %c32 = arith.constant 32 : index
    %c0_3 = arith.constant 0 : index
    %2 = vector.load %arg2[%c32, %c0_3] : memref<312x128xf32, #tpu.memory_space<vmem>>, vector<1x128xf32>
    %c40 = arith.constant 40 : index
    %c0_4 = arith.constant 0 : index
    %3 = vector.load %arg2[%c40, %c0_4] : memref<312x128xf32, #tpu.memory_space<vmem>>, vector<128x128xf32>
    %c168 = arith.constant 168 : index
    %c0_5 = arith.constant 0 : index
    %4 = vector.load %arg2[%c168, %c0_5] : memref<312x128xf32, #tpu.memory_space<vmem>>, vector<1x128xf32>
    %c176 = arith.constant 176 : index
    %c0_6 = arith.constant 0 : index
    %5 = vector.load %arg2[%c176, %c0_6] : memref<312x128xf32, #tpu.memory_space<vmem>>, vector<128x128xf32>
    %c304 = arith.constant 304 : index
    %c0_7 = arith.constant 0 : index
    %6 = vector.load %arg2[%c304, %c0_7] : memref<312x128xf32, #tpu.memory_space<vmem>>, vector<1x128xf32>
    %cst = arith.constant dense<0.000000e+00> : vector<8x128xf32>
    %7 = tpu.matmul %0, %1, %cst {dimension_numbers = #tpu.dot_dimension_numbers<[1], [0], [0], [1], [0, 0, 1, 1], [], []>} : vector<8x32xf32>, vector<32x128xf32>, vector<8x128xf32> -> vector<8x128xf32>
    %8 = vector.broadcast %2 : vector<1x128xf32> to vector<8x128xf32>
    %9 = arith.addf %7, %8 : vector<8x128xf32>
    %cst_8 = arith.constant 0.000000e+00 : f32
    %10 = vector.broadcast %cst_8 : f32 to vector<8x128xf32>
    %11 = arith.maximumf %9, %10 : vector<8x128xf32>
    %cst_9 = arith.constant dense<0.000000e+00> : vector<8x128xf32>
    %12 = tpu.matmul %11, %3, %cst_9 {dimension_numbers = #tpu.dot_dimension_numbers<[1], [0], [0], [1], [0, 0, 1, 1], [], []>} : vector<8x128xf32>, vector<128x128xf32>, vector<8x128xf32> -> vector<8x128xf32>
    %13 = vector.broadcast %4 : vector<1x128xf32> to vector<8x128xf32>
    %14 = arith.addf %12, %13 : vector<8x128xf32>
    %cst_10 = arith.constant 0.000000e+00 : f32
    %15 = vector.broadcast %cst_10 : f32 to vector<8x128xf32>
    %16 = arith.maximumf %14, %15 : vector<8x128xf32>
    %cst_11 = arith.constant dense<0.000000e+00> : vector<8x128xf32>
    %17 = tpu.matmul %16, %5, %cst_11 {dimension_numbers = #tpu.dot_dimension_numbers<[1], [0], [0], [1], [0, 0, 1, 1], [], []>} : vector<8x128xf32>, vector<128x128xf32>, vector<8x128xf32> -> vector<8x128xf32>
    %18 = vector.broadcast %6 : vector<1x128xf32> to vector<8x128xf32>
    %19 = arith.addf %17, %18 : vector<8x128xf32>
    %c0_12 = arith.constant 0 : index
    %c0_13 = arith.constant 0 : index
    %20 = vector.load %arg3[%c0_12, %c0_13] : memref<8x128xf32, #tpu.memory_space<vmem>>, vector<8x128xf32>
    tpu.vector_store %arg3[%c0_12, %c0_13], %19 {strides = array<i32>} : memref<8x128xf32, #tpu.memory_space<vmem>>, vector<8x128xf32>,
    return
  }
  func.func @transform_0(%arg0: i32) -> (i32, i32) {
    %c0_i32 = arith.constant 0 : i32
    %c0_i32_0 = arith.constant 0 : i32
    return %arg0, %c0_i32 : i32, i32
  }
  func.func @transform_1(%arg0: i32) -> (i32, i32) {
    %c0_i32 = arith.constant 0 : i32
    %c0_i32_0 = arith.constant 0 : i32
    %c0_i32_1 = arith.constant 0 : i32
    return %c0_i32, %c0_i32_0 : i32, i32
  }
  func.func @transform_2(%arg0: i32) -> (i32, i32) {
    %c0_i32 = arith.constant 0 : i32
    %c0_i32_0 = arith.constant 0 : i32
    return %arg0, %c0_i32 : i32, i32
  }
}

</mosaic_0001>

<llo_original>
// kernel: dqn_forward.1
$region0: #{dqn_forward.1}
  #allocation0 [shape = 'u32[]', space=smem, size = 0x4, offset = 0x4, fixed_abs, tag = 'smem constant byte address 0x4 - core index']
  #allocation1 [shape = 'u32[72,128]{1,0:T(1,128)}', space=vmem, size = 0x9000, scoped, tag = 'internal scratch']
  %s0 = inlined_call_operand.hbm [shape: f32[8,32], index: 0, kind: input, shape index: {}]
  %s1 = inlined_call_operand.hbm [shape: f32[312,128], index: 1, kind: input, shape index: {}]
  %s2 = inlined_call_operand.vmem [shape: f32[8,128], index: 2, kind: output, shape index: {}]
  %s3 = sld [smem:[#allocation0]]
  $region26: #{dqn_forward.1} parent=0
    _
  %s5 = ssub.s32 1, %s3
  %s6 = scalar_select 0, %s5, %s3
  $region1: #{dqn_forward.1} parent=0
    #allocation2 [shape = 'u8[4096]{0}', space=vmem, size = 0x1000, scoped, tag = 'input window, operand 0, single buffered']
    #allocation3 [shape = 's32[1]{0}', space=sflag, size = 0x4, scoped, tag = 'scoped memory for dqn_forward.1']
    #allocation4 [shape = 'u8[159744]{0}', space=vmem, size = 0x27000, scoped, tag = 'input window, operand 1, single buffered']
    #allocation5 [shape = 's32[1]{0}', space=sflag, size = 0x4, scoped, tag = 'scoped memory for dqn_forward.1']
    %7 = vsyncpa [#allocation3], 0
    %8 = vsyncpa [#allocation5], 0
    // Predicated region
    $region2: #{dqn_forward.1} parent=1 // pred_check
      _
    $region3: #{dqn_forward.1} parent=1 // pred_check_branch
      %10 = sbr.rel (0) target = $region5
    $region4: #{dqn_forward.1} parent=1 // pred_region
      %12 = vsyncadd [#allocation3], 0
      %s14 = sshll.u32 %s0, 4
      %s15 = int_to_ptr.hbm [resolvable:$true] %s14
      %s16 = sshll.u32 [#allocation2], 4
      %s17 = int_to_ptr.vmem [resolvable:$true] %s16
      %19 = dma.hbm_to_vmem [thread:$0]  %s15, 128, %s17, [#allocation3]
    $region5: #{dqn_forward.1} parent=1 // pred_fallthru
      _
    // Predicated region
    $region6: #{dqn_forward.1} parent=1 // pred_check
      _
    $region7: #{dqn_forward.1} parent=1 // pred_check_branch
      %21 = sbr.rel (0) target = $region9
    $region8: #{dqn_forward.1} parent=1 // pred_region
      %23 = vsyncadd [#allocation5], 0
      %s24 = sshll.u32 %s1, 4
      %s25 = int_to_ptr.hbm [resolvable:$true] %s24
      %s26 = sshll.u32 [#allocation4], 4
      %s27 = int_to_ptr.vmem [resolvable:$true] %s26
      %32 = dma.hbm_to_vmem [thread:$0]  %s25, 4992, %s27, [#allocation5], 128, 128, 8
    $region9: #{dqn_forward.1} parent=1 // pred_fallthru
      _
    // Predicated region
    $region10: #{dqn_forward.1} parent=1 // pred_check
      _
    $region11: #{dqn_forward.1} parent=1 // pred_check_branch
      %34 = sbr.rel (0) target = $region13
    $region12: #{dqn_forward.1} parent=1 // pred_region
      %36 = dma.done [#allocation3], 128
    $region13: #{dqn_forward.1} parent=1 // pred_fallthru
      _
    // Predicated region
    $region14: #{dqn_forward.1} parent=1 // pred_check
      _
    $region15: #{dqn_forward.1} parent=1 // pred_check_branch
      %38 = sbr.rel (0) target = $region17
    $region16: #{dqn_forward.1} parent=1 // pred_region
      %40 = dma.done [#allocation5], 4992
    $region17: #{dqn_forward.1} parent=1 // pred_fallthru
      _
    %v41 = vld [vmem:[#allocation2] sm:$0xff]
    %v42 = vld [vmem:[#allocation4] sm:$0xff]
    %v43 = vld [vmem:[#allocation4 + $0x8] sm:$0xff]
    %v44 = vld [vmem:[#allocation4 + $0x10] sm:$0xff]
    %v45 = vld [vmem:[#allocation4 + $0x18] sm:$0xff]
    %v46 = vld [vmem:[#allocation4 + $0x20] sm:$0x1]
    %v47 = vld [vmem:[#allocation4 + $0x28] sm:$0xff]
    %v48 = vld [vmem:[#allocation4 + $0x30] sm:$0xff]
    %v49 = vld [vmem:[#allocation4 + $0x38] sm:$0xff]
    %v50 = vld [vmem:[#allocation4 + $0x40] sm:$0xff]
    %v51 = vld [vmem:[#allocation4 + $0x48] sm:$0xff]
    %v52 = vld [vmem:[#allocation4 + $0x50] sm:$0xff]
    %v53 = vld [vmem:[#allocation4 + $0x58] sm:$0xff]
    %v54 = vld [vmem:[#allocation4 + $0x60] sm:$0xff]
    %v55 = vld [vmem:[#allocation4 + $0x68] sm:$0xff]
    %v56 = vld [vmem:[#allocation4 + $0x70] sm:$0xff]
    %v57 = vld [vmem:[#allocation4 + $0x78] sm:$0xff]
    %v58 = vld [vmem:[#allocation4 + $0x80] sm:$0xff]
    %v59 = vld [vmem:[#allocation4 + $0x88] sm:$0xff]
    %v60 = vld [vmem:[#allocation4 + $0x90] sm:$0xff]
    %v61 = vld [vmem:[#allocation4 + $0x98] sm:$0xff]
    %v62 = vld [vmem:[#allocation4 + $0xa0] sm:$0xff]
    %v63 = vld [vmem:[#allocation4 + $0xa8] sm:$0x1]
    %v64 = vld [vmem:[#allocation4 + $0xb0] sm:$0xff]
    %v65 = vld [vmem:[#allocation4 + $0xb8] sm:$0xff]
    %v66 = vld [vmem:[#allocation4 + $0xc0] sm:$0xff]
    %v67 = vld [vmem:[#allocation4 + $0xc8] sm:$0xff]
    %v68 = vld [vmem:[#allocation4 + $0xd0] sm:$0xff]
    %v69 = vld [vmem:[#allocation4 + $0xd8] sm:$0xff]
    %v70 = vld [vmem:[#allocation4 + $0xe0] sm:$0xff]
    %v71 = vld [vmem:[#allocation4 + $0xe8] sm:$0xff]
    %v72 = vld [vmem:[#allocation4 + $0xf0] sm:$0xff]
    %v73 = vld [vmem:[#allocation4 + $0xf8] sm:$0xff]
    %v74 = vld [vmem:[#allocation4 + $0x100] sm:$0xff]
    %v75 = vld [vmem:[#allocation4 + $0x108] sm:$0xff]
    %v76 = vld [vmem:[#allocation4 + $0x110] sm:$0xff]
    %v77 = vld [vmem:[#allocation4 + $0x118] sm:$0xff]
    %v78 = vld [vmem:[#allocation4 + $0x120] sm:$0xff]
    %v79 = vld [vmem:[#allocation4 + $0x128] sm:$0xff]
    %v80 = vld [vmem:[#allocation4 + $0x130] sm:$0x1]
    %v81 = vperm.slane %v46, 0
    %vm82 = vcmask 261120
    %v84 = vsel %vm82, %v41, 0
    %86 = vmatpush.msra.mxu0 0.0
    %87 = vmatpush.msra.mxu0 0.0
    %88 = vmatpush.msra.mxu0 0.0
    %89 = vmatpush.msra.mxu0 0.0
    %90 = vmatpush.msra.mxu0 0.0
    %91 = vmatpush.msra.mxu0 0.0
    %92 = vmatpush.msra.mxu0 0.0
    %93 = vmatpush.msra.mxu0 0.0
    %94 = vmatpush.msra.mxu0 0.0
    %95 = vmatpush.msra.mxu0 0.0
    %96 = vmatpush.msra.mxu0 0.0
    %97 = vmatpush.msra.mxu0 0.0
    %98 = vmatpush.msra.mxu0 %v45
    %99 = vmatpush.msra.mxu0 %v44
    %100 = vmatpush.msra.mxu0 %v43
    %101 = vmatpush.msra.mxu0 %v42
    %102 = vmatmul.f32.gmra.mxu0 %v84
    %v103 = vpop.f32.mrf.mxu0
    %v104 = vadd.f32 %v81, %v103
    %105 = vdwg.mxu0
    %v106 = vmax.f32 %v104, 0.0
    %v107 = vperm.slane %v63, 0
    %108 = vmatpush.msra.mxu0 %v62
    %109 = vmatpush.msra.mxu0 %v61
    %110 = vmatpush.msra.mxu0 %v60
    %111 = vmatpush.msra.mxu0 %v59
    %112 = vmatpush.msra.mxu0 %v58
    %113 = vmatpush.msra.mxu0 %v57
    %114 = vmatpush.msra.mxu0 %v56
    %115 = vmatpush.msra.mxu0 %v55
    %116 = vmatpush.msra.mxu0 %v54
    %117 = vmatpush.msra.mxu0 %v53
    %118 = vmatpush.msra.mxu0 %v52
    %119 = vmatpush.msra.mxu0 %v51
    %120 = vmatpush.msra.mxu0 %v50
    %121 = vmatpush.msra.mxu0 %v49
    %122 = vmatpush.msra.mxu0 %v48
    %123 = vmatpush.msra.mxu0 %v47
    %124 = vmatmul.f32.gmra.mxu0 %v106
    %v125 = vpop.f32.mrf.mxu0
    %v126 = vadd.f32 %v107, %v125
    %127 = vdwg.mxu0
    %v128 = vmax.f32 %v126, 0.0
    %v129 = vperm.slane %v80, 0
    %130 = vmatpush.msra.mxu0 %v79
    %131 = vmatpush.msra.mxu0 %v78
    %132 = vmatpush.msra.mxu0 %v77
    %133 = vmatpush.msra.mxu0 %v76
    %134 = vmatpush.msra.mxu0 %v75
    %135 = vmatpush.msra.mxu0 %v74
    %136 = vmatpush.msra.mxu0 %v73
    %137 = vmatpush.msra.mxu0 %v72
    %138 = vmatpush.msra.mxu0 %v71
    %139 = vmatpush.msra.mxu0 %v70
    %140 = vmatpush.msra.mxu0 %v69
    %141 = vmatpush.msra.mxu0 %v68
    %142 = vmatpush.msra.mxu0 %v67
    %143 = vmatpush.msra.mxu0 %v66
    %144 = vmatpush.msra.mxu0 %v65
    %145 = vmatpush.msra.mxu0 %v64
    %146 = vmatmul.f32.gmra.mxu0 %v128
    %v147 = vpop.f32.mrf.mxu0
    %v148 = vadd.f32 %v129, %v147
    %149 = vdwg.mxu0
    %150 = vst [vmem:[%s2] sm:$0xff] %v148
    // Predicated region
    $region18: #{dqn_forward.1} parent=1 // pred_check
      _
    $region19: #{dqn_forward.1} parent=1 // pred_check_branch
      %152 = sbr.rel (0) target = $region21
    $region20: #{dqn_forward.1} parent=1 // pred_region
      _
    $region21: #{dqn_forward.1} parent=1 // pred_fallthru
      _
    // Predicated region
    $region22: #{dqn_forward.1} parent=1 // pred_check
      _
    $region23: #{dqn_forward.1} parent=1 // pred_check_branch
      %154 = sbr.rel (0) target = $region25
    $region24: #{dqn_forward.1} parent=1 // pred_region
      _
    $region25: #{dqn_forward.1} parent=1 // pred_fallthru
      _
    %155 = vsyncpa [#allocation3], 1
    %156 = vsyncpa [#allocation5], 1

</llo_original>
